<compile_context>
chip_gen: v7x
topology: tpu7x:2x2x1
jax: 0.10.0
libtpu: 0.0.40
codegen_flags: <defaults>
</compile_context>

<pallas_src>
import jax
import jax.numpy as jnp
from jax.experimental import pallas as pl
from jax.experimental.pallas import tpu as pltpu

LN_EPS = 1e-5  # nn.LayerNorm default


def _round_up(x, m):
    return ((x + m - 1) // m) * m


def _patch_tokenizer_kernel(x_ref, w_ref, g_ref, b_ref, o_ref):
    # x_ref: (TM, K)  K = 22*patch flattened patch pixels (lane-dense, K pads 220->256)
    # w_ref: (K, D)   conv weight as a single matmul operand, VMEM-resident
    # g_ref: (1, D)   LayerNorm gamma
    # b_ref: (1, D)   LayerNorm beta
    # o_ref: (TM, D)  output tokens
    acc = jnp.dot(x_ref[...], w_ref[...], preferred_element_type=jnp.float32)

    # LayerNorm over the feature axis (biased variance, like nn.LayerNorm).
    mean = jnp.mean(acc, axis=-1, keepdims=True)
    centered = acc - mean
    var = jnp.mean(centered * centered, axis=-1, keepdims=True)
    inv = jax.lax.rsqrt(var + LN_EPS)

    gamma = g_ref[...].astype(jnp.float32)  # (1, D) broadcasts over rows
    beta = b_ref[...].astype(jnp.float32)
    o_ref[...] = (centered * inv * gamma + beta).astype(o_ref.dtype)


def patch_tokenizer(x, conv_w, gamma, beta, *, patch_size, token_tile=512,
                    compute_dtype=None):
    """x: (B, 1, H, W) NCHW with W = T*patch_size and H == conv kernel height.
    conv_w: (dim, 1, H, patch_size).  Returns (B, T, dim)."""
    B, C, H, W = x.shape
    assert C == 1 and W % patch_size == 0
    D = conv_w.shape[0]
    T = W // patch_size
    M = B * T
    K = H * patch_size
    out_dtype = x.dtype

    # Patch-major activation: (B,1,H,W) -> (B,H,T,p) -> (B,T,H,p) -> (M, K).
    # One-time XLA transpose in HBM; each kernel tile then reads a contiguous,
    # lane-dense (TM, K) block and does a single K=220 MXU matmul.
    x_p = (x.reshape(B, H, T, patch_size)
             .transpose(0, 2, 1, 3)
             .reshape(M, K))
    # Tiny one-time weight relayout: (D, 1, H, patch) -> (K, D).
    w2 = jnp.transpose(conv_w.reshape(D, K), (1, 0))
    g2 = gamma.reshape(1, D)
    b2 = beta.reshape(1, D)

    if compute_dtype is not None:  # e.g. jnp.bfloat16 to halve input HBM bytes
        x_p = x_p.astype(compute_dtype)
        w2 = w2.astype(compute_dtype)

    # Token tile: 512 tokens is ~86% of the measured HBM roofline and only
    # ~450 KiB per x buffer at K=220 f32, so double-buffering fits easily under
    # the 32 MiB scoped VMEM limit on v5e/v6e/v7x.
    TM = token_tile if M >= token_tile else _round_up(M, 8)
    Mp = _round_up(M, TM)
    if Mp != M:
        # Zero-pad the tail tile; zeros stay finite through LayerNorm and the
        # padded rows are sliced off below.
        x_p = jnp.pad(x_p, ((0, Mp - M), (0, 0)))
    nM = Mp // TM

    in_itemsize = jnp.dtype(x_p.dtype).itemsize
    cost = pl.CostEstimate(
        flops=2 * Mp * K * D,
        transcendentals=Mp,  # one rsqrt per token
        bytes_accessed=(Mp * K * in_itemsize
                        + K * D * jnp.dtype(w2.dtype).itemsize
                        + Mp * D * jnp.dtype(out_dtype).itemsize),
    )

    out = pl.pallas_call(
        _patch_tokenizer_kernel,
        out_shape=jax.ShapeDtypeStruct((Mp, D), out_dtype),
        grid=(nM,),
        in_specs=[
            pl.BlockSpec((TM, K), lambda i: (i, 0)),
            pl.BlockSpec((K, D), lambda i: (0, 0)),   # VMEM-resident weight
            pl.BlockSpec((1, D), lambda i: (0, 0)),   # gamma
            pl.BlockSpec((1, D), lambda i: (0, 0)),   # beta
        ],
        out_specs=pl.BlockSpec((TM, D), lambda i: (i, 0)),
        compiler_params=pltpu.CompilerParams(
            dimension_semantics=("parallel",),        # 1-D grid: both v7x TCs busy
            vmem_limit_bytes=32 * 1024 * 1024,
        ),
        cost_estimate=cost,
    )(x_p, w2, g2, b2)

    return out[:M].reshape(B, T, D)


if __name__ == "__main__":
    patch_size = 10
    dim = 32
    B = 2
    T = 8                      # number of patches (tokens)
    Wd = T * patch_size        # input width = 80
    Hd = 22                    # conv kernel/stride covers full height

    key = jax.random.PRNGKey(0)
    kx, kw = jax.random.split(key)

    x = jax.random.normal(kx, (B, 1, Hd, Wd), dtype=jnp.float32)
    conv_w = 0.02 * jax.random.normal(kw, (dim, 1, Hd, patch_size), dtype=jnp.float32)
    gamma = jnp.ones((dim,), dtype=jnp.float32)   # nn.LayerNorm default init
    beta = jnp.zeros((dim,), dtype=jnp.float32)

    out = patch_tokenizer(x, conv_w, gamma, beta, patch_size=patch_size)
    out = jax.block_until_ready(out)

    # Pure-JAX reference (conv-as-matmul + LayerNorm).
    patches_ref = (x[:, 0, :, :].reshape(B, Hd, T, patch_size)
                   .transpose(0, 2, 1, 3).reshape(B * T, Hd * patch_size))
    y_ref = patches_ref @ conv_w.reshape(dim, -1).T
    mu = y_ref.mean(-1, keepdims=True)
    var = ((y_ref - mu) ** 2).mean(-1, keepdims=True)
    ref = ((y_ref - mu) / jnp.sqrt(var + LN_EPS) * gamma + beta).reshape(B, T, dim)

    assert out.shape == (B, T, dim)
    assert jnp.allclose(out, ref, atol=1e-4, rtol=1e-4)

    print("KERNEL_OK")
</pallas_src>

<mosaic_0001>
module attributes {stable_mosaic.version = 11 : i64} {
  func.func @_patch_tokenizer_kernel(%arg0: i32, %arg1: memref<16x220xf32, #tpu.memory_space<vmem>>, %arg2: memref<220x32xf32, #tpu.memory_space<vmem>>, %arg3: memref<1x32xf32, #tpu.memory_space<vmem>>, %arg4: memref<1x32xf32, #tpu.memory_space<vmem>>, %arg5: memref<16x32xf32, #tpu.memory_space<vmem>>) attributes {dimension_semantics = [#tpu.dimension_semantics<parallel>], iteration_bounds = array<i64: 1>, scalar_prefetch = 0 : i64, scratch_operands = 0 : i64, tpu.core_type = #tpu.core_type<tc>, window_params = [{transform_indices = @transform_0, window_bounds = array<i64: 16, 220>}, {pipeline_mode = #tpu.pipeline_mode<synchronous>, transform_indices = @transform_1, window_bounds = array<i64: 220, 32>}, {pipeline_mode = #tpu.pipeline_mode<synchronous>, transform_indices = @transform_2, window_bounds = array<i64: 1, 32>}, {pipeline_mode = #tpu.pipeline_mode<synchronous>, transform_indices = @transform_3, window_bounds = array<i64: 1, 32>}, {transform_indices = @transform_4, window_bounds = array<i64: 16, 32>}]} {
    %c0 = arith.constant 0 : index
    %c0_0 = arith.constant 0 : index
    %0 = vector.load %arg1[%c0, %c0_0] : memref<16x220xf32, #tpu.memory_space<vmem>>, vector<16x220xf32>
    %c0_1 = arith.constant 0 : index
    %c0_2 = arith.constant 0 : index
    %1 = vector.load %arg2[%c0_1, %c0_2] : memref<220x32xf32, #tpu.memory_space<vmem>>, vector<220x32xf32>
    %cst = arith.constant dense<0.000000e+00> : vector<16x32xf32>
    %2 = tpu.matmul %0, %1, %cst {dimension_numbers = #tpu.dot_dimension_numbers<[1], [0], [0], [1], [0, 0, 1, 1], [], []>} : vector<16x220xf32>, vector<220x32xf32>, vector<16x32xf32> -> vector<16x32xf32>
    %cst_3 = arith.constant dense<0.000000e+00> : vector<16xf32>
    %3 = vector.multi_reduction <add>, %2, %cst_3 [1] : vector<16x32xf32> to vector<16xf32>
    %4 = vector.shape_cast %3 : vector<16xf32> to vector<16x1xf32>
    %cst_4 = arith.constant 3.200000e+01 : f32
    %5 = vector.broadcast %cst_4 : f32 to vector<16x1xf32>
    %6 = arith.divf %4, %5 : vector<16x1xf32>
    %7 = vector.broadcast %6 : vector<16x1xf32> to vector<16x32xf32>
    %8 = arith.subf %2, %7 : vector<16x32xf32>
    %9 = arith.mulf %8, %8 : vector<16x32xf32>
    %cst_5 = arith.constant dense<0.000000e+00> : vector<16xf32>
    %10 = vector.multi_reduction <add>, %9, %cst_5 [1] : vector<16x32xf32> to vector<16xf32>
    %11 = vector.shape_cast %10 : vector<16xf32> to vector<16x1xf32>
    %cst_6 = arith.constant 3.200000e+01 : f32
    %12 = vector.broadcast %cst_6 : f32 to vector<16x1xf32>
    %13 = arith.divf %11, %12 : vector<16x1xf32>
    %cst_7 = arith.constant 9.99999974E-6 : f32
    %14 = vector.broadcast %cst_7 : f32 to vector<16x1xf32>
    %15 = arith.addf %13, %14 : vector<16x1xf32>
    %16 = math.rsqrt %15 : vector<16x1xf32>
    %c0_8 = arith.constant 0 : index
    %c0_9 = arith.constant 0 : index
    %17 = vector.load %arg3[%c0_8, %c0_9] : memref<1x32xf32, #tpu.memory_space<vmem>>, vector<1x32xf32>
    %c0_10 = arith.constant 0 : index
    %c0_11 = arith.constant 0 : index
    %18 = vector.load %arg4[%c0_10, %c0_11] : memref<1x32xf32, #tpu.memory_space<vmem>>, vector<1x32xf32>
    %19 = vector.broadcast %16 : vector<16x1xf32> to vector<16x32xf32>
    %20 = arith.mulf %8, %19 : vector<16x32xf32>
    %21 = vector.broadcast %17 : vector<1x32xf32> to vector<16x32xf32>
    %22 = arith.mulf %20, %21 : vector<16x32xf32>
    %23 = vector.broadcast %18 : vector<1x32xf32> to vector<16x32xf32>
    %24 = arith.addf %22, %23 : vector<16x32xf32>
    %c0_12 = arith.constant 0 : index
    %c0_13 = arith.constant 0 : index
    %25 = vector.load %arg5[%c0_12, %c0_13] : memref<16x32xf32, #tpu.memory_space<vmem>>, vector<16x32xf32>
    tpu.vector_store %arg5[%c0_12, %c0_13], %24 {strides = array<i32>} : memref<16x32xf32, #tpu.memory_space<vmem>>, vector<16x32xf32>,
    return
  }
  func.func @transform_0(%arg0: i32) -> (i32, i32) {
    %c0_i32 = arith.constant 0 : i32
    %c0_i32_0 = arith.constant 0 : i32
    return %arg0, %c0_i32 : i32, i32
  }
  func.func @transform_1(%arg0: i32) -> (i32, i32) {
    %c0_i32 = arith.constant 0 : i32
    %c0_i32_0 = arith.constant 0 : i32
    %c0_i32_1 = arith.constant 0 : i32
    return %c0_i32, %c0_i32_0 : i32, i32
  }
  func.func @transform_2(%arg0: i32) -> (i32, i32) {
    %c0_i32 = arith.constant 0 : i32
    %c0_i32_0 = arith.constant 0 : i32
    %c0_i32_1 = arith.constant 0 : i32
    return %c0_i32, %c0_i32_0 : i32, i32
  }
  func.func @transform_3(%arg0: i32) -> (i32, i32) {
    %c0_i32 = arith.constant 0 : i32
    %c0_i32_0 = arith.constant 0 : i32
    %c0_i32_1 = arith.constant 0 : i32
    return %c0_i32, %c0_i32_0 : i32, i32
  }
  func.func @transform_4(%arg0: i32) -> (i32, i32) {
    %c0_i32 = arith.constant 0 : i32
    %c0_i32_0 = arith.constant 0 : i32
    return %arg0, %c0_i32 : i32, i32
  }
}

</mosaic_0001>

<llo_original>
// kernel: tpu_custom_call.1
$region0: #{tpu_custom_call.1}
  #allocation0 [shape = 'u32[]', space=smem, size = 0x4, offset = 0x4, fixed_abs, tag = 'smem constant byte address 0x4 - core index']
  #allocation1 [shape = 'u32[144,128]{1,0:T(1,128)}', space=vmem, size = 0x12000, scoped, tag = 'internal scratch']
  %s0 = inlined_call_operand.vmem [shape: f32[16,220], index: 0, kind: input, shape index: {}]
  %s1 = inlined_call_operand.vmem [shape: f32[220,32], index: 1, kind: input, shape index: {}]
  %s2 = inlined_call_operand.vmem [shape: f32[1,32], index: 2, kind: input, shape index: {}]
  %s3 = inlined_call_operand.vmem [shape: f32[1,32], index: 3, kind: input, shape index: {}]
  %s4 = inlined_call_operand.hbm [shape: f32[16,32], index: 4, kind: output, shape index: {}]
  %s5 = sld [smem:[#allocation0]]
  $region26: #{tpu_custom_call.1} parent=0
    _
  %s7 = ssub.s32 1, %s5
  %s8 = scalar_select 0, %s7, %s5
  $region1: #{tpu_custom_call.1} parent=0
    #allocation2 [shape = 'u8[8192]{0}', space=vmem, size = 0x2000, scoped, tag = 'output window, operand 0, single buffered']
    #allocation3 [shape = 's32[1]{0}', space=sflag, size = 0x4, scoped, tag = 'scoped memory for tpu_custom_call.1']
    %9 = vsyncpa [#allocation3], 0
    // Predicated region
    $region2: #{tpu_custom_call.1} parent=1 // pred_check
      _
    $region3: #{tpu_custom_call.1} parent=1 // pred_check_branch
      %11 = sbr.rel (0) target = $region5
    $region4: #{tpu_custom_call.1} parent=1 // pred_region
      _
    $region5: #{tpu_custom_call.1} parent=1 // pred_fallthru
      _
    // Predicated region
    $region6: #{tpu_custom_call.1} parent=1 // pred_check
      _
    $region7: #{tpu_custom_call.1} parent=1 // pred_check_branch
      %13 = sbr.rel (0) target = $region9
    $region8: #{tpu_custom_call.1} parent=1 // pred_region
      _
    $region9: #{tpu_custom_call.1} parent=1 // pred_fallthru
      _
    // Predicated region
    $region10: #{tpu_custom_call.1} parent=1 // pred_check
      _
    $region11: #{tpu_custom_call.1} parent=1 // pred_check_branch
      %15 = sbr.rel (0) target = $region13
    $region12: #{tpu_custom_call.1} parent=1 // pred_region
      _
    $region13: #{tpu_custom_call.1} parent=1 // pred_fallthru
      _
    // Predicated region
    $region14: #{tpu_custom_call.1} parent=1 // pred_check
      _
    $region15: #{tpu_custom_call.1} parent=1 // pred_check_branch
      %17 = sbr.rel (0) target = $region17
    $region16: #{tpu_custom_call.1} parent=1 // pred_region
      _
    $region17: #{tpu_custom_call.1} parent=1 // pred_fallthru
      _
    %v18 = vld [vmem:[%s0] sm:$0xff]
    %v19 = vld [vmem:[%s0 + $0x8] sm:$0xff]
    %v20 = vld [vmem:[%s0 + $0x10] sm:$0xff]
    %v21 = vld [vmem:[%s0 + $0x18] sm:$0xff]
    %v22 = vld [vmem:[%s1] sm:$0xff]
    %v23 = vld [vmem:[%s1 + $0x8] sm:$0xff]
    %v24 = vld [vmem:[%s1 + $0x10] sm:$0xff]
    %v25 = vld [vmem:[%s1 + $0x18] sm:$0xff]
    %v26 = vld [vmem:[%s1 + $0x20] sm:$0xff]
    %v27 = vld [vmem:[%s1 + $0x28] sm:$0xff]
    %v28 = vld [vmem:[%s1 + $0x30] sm:$0xff]
    %v29 = vld [vmem:[%s1 + $0x38] sm:$0xff]
    %v30 = vld [vmem:[%s1 + $0x40] sm:$0xff]
    %v31 = vld [vmem:[%s1 + $0x48] sm:$0xff]
    %v32 = vld [vmem:[%s1 + $0x50] sm:$0xff]
    %v33 = vld [vmem:[%s1 + $0x58] sm:$0xff]
    %v34 = vld [vmem:[%s1 + $0x60] sm:$0xff]
    %v35 = vld [vmem:[%s1 + $0x68] sm:$0xff]
    %v36 = vld [vmem:[%s1 + $0x70] sm:$0xff]
    %v37 = vld [vmem:[%s1 + $0x78] sm:$0xff]
    %v38 = vld [vmem:[%s1 + $0x80] sm:$0xff]
    %v39 = vld [vmem:[%s1 + $0x88] sm:$0xff]
    %v40 = vld [vmem:[%s1 + $0x90] sm:$0xff]
    %v41 = vld [vmem:[%s1 + $0x98] sm:$0xff]
    %v42 = vld [vmem:[%s1 + $0xa0] sm:$0xff]
    %v43 = vld [vmem:[%s1 + $0xa8] sm:$0xff]
    %v44 = vld [vmem:[%s1 + $0xb0] sm:$0xff]
    %v45 = vld [vmem:[%s1 + $0xb8] sm:$0xff]
    %v46 = vld [vmem:[%s1 + $0xc0] sm:$0xff]
    %v47 = vld [vmem:[%s1 + $0xc8] sm:$0xff]
    %v48 = vld [vmem:[%s1 + $0xd0] sm:$0xff]
    %v49 = vld [vmem:[%s1 + $0xd8] sm:$0xf]
    %vm50 = vcmask 752640
    %v52 = vsel %vm50, %v19, 0
    %v55 = vsel %vm50, %v21, 0
    %vm57 = vcmask 1043456
    %v59 = vsel %vm57, %v49, 0
    %61 = vmatprep.subr.mxu0 0.0
    %62 = vmatpush1.msra.mxu0 %v22
    %63 = vmatprep.subr.mxu0 0.0
    %64 = vmatpush1.msra.mxu0 %v23
    %65 = vmatprep.subr.mxu0 0.0
    %66 = vmatpush1.msra.mxu0 %v24
    %67 = vmatprep.subr.mxu0 0.0
    %68 = vmatpush1.msra.mxu0 %v25
    %69 = vmatprep.subr.mxu0 0.0
    %70 = vmatpush1.msra.mxu0 %v26
    %71 = vmatprep.subr.mxu0 0.0
    %72 = vmatpush1.msra.mxu0 %v27
    %73 = vmatprep.subr.mxu0 0.0
    %74 = vmatpush1.msra.mxu0 %v28
    %75 = vmatprep.subr.mxu0 0.0
    %76 = vmatpush1.msra.mxu0 %v29
    %77 = vmatprep.subr.mxu0 0.0
    %78 = vmatpush1.msra.mxu0 %v30
    %79 = vmatprep.subr.mxu0 0.0
    %80 = vmatpush1.msra.mxu0 %v31
    %81 = vmatprep.subr.mxu0 0.0
    %82 = vmatpush1.msra.mxu0 %v32
    %83 = vmatprep.subr.mxu0 0.0
    %84 = vmatpush1.msra.mxu0 %v33
    %85 = vmatprep.subr.mxu0 0.0
    %86 = vmatpush1.msra.mxu0 %v34
    %87 = vmatprep.subr.mxu0 0.0
    %88 = vmatpush1.msra.mxu0 %v35
    %89 = vmatprep.subr.mxu0 0.0
    %90 = vmatpush1.msra.mxu0 %v36
    %91 = vmatprep.subr.mxu0 0.0
    %92 = vmatpush1.msra.mxu0 %v37
    %93 = vmatprep.subr.mxu0 0.0
    %94 = vmatpush1.msra.mxu0 %v38
    %95 = vmatprep.subr.mxu0 0.0
    %96 = vmatpush1.msra.mxu0 %v39
    %97 = vmatprep.subr.mxu0 0.0
    %98 = vmatpush1.msra.mxu0 %v40
    %99 = vmatprep.subr.mxu0 0.0
    %100 = vmatpush1.msra.mxu0 %v41
    %101 = vmatprep.subr.mxu0 0.0
    %102 = vmatpush1.msra.mxu0 %v42
    %103 = vmatprep.subr.mxu0 0.0
    %104 = vmatpush1.msra.mxu0 %v43
    %105 = vmatprep.subr.mxu0 0.0
    %106 = vmatpush1.msra.mxu0 %v44
    %107 = vmatprep.subr.mxu0 0.0
    %108 = vmatpush1.msra.mxu0 %v45
    %109 = vmatprep.subr.mxu0 0.0
    %110 = vmatpush1.msra.mxu0 %v46
    %111 = vmatprep.subr.mxu0 0.0
    %112 = vmatpush1.msra.mxu0 %v47
    %113 = vmatprep.subr.mxu0 0.0
    %114 = vmatpush1.msra.mxu0 %v48
    %115 = vmatprep.subr.mxu0 0.0
    %116 = vmatpush1.msra.mxu0 %v59
    %117 = vmatprep.subr.mxu0 0.0
    %118 = vmatpush1.msra.mxu0 0.0
    %119 = vmatprep.subr.mxu0 0.0
    %120 = vmatpush1.msra.mxu0 0.0
    %121 = vmatprep.subr.mxu0 0.0
    %122 = vmatpush1.msra.mxu0 0.0
    %123 = vmatprep.subr.mxu0 0.0
    %124 = vmatpush1.msra.mxu0 0.0
    %125 = vmatprep.mubr.f32.mxu0 %v52
    %126 = vmatmul.mubr.f32.gmra.mrb[0].mxu0 %v18
    %v127 = vpop.f32.mrb[0].mxu0
    %v128 = vadd.f32 0.0, %v127
    %v129 = vpop.f32.mrb[0].mxu0
    %130 = vmatprep.mubr.f32.mxu0 %v55
    %131 = vmatmul.mubr.f32.gmra.mrb[0].mxu0 %v20
    %v132 = vpop.f32.mrb[0].mxu0
    %v133 = vadd.f32 0.0, %v132
    %v134 = vpop.f32.mrb[0].mxu0
    %135 = vdwg.mxu0
    %vm136 = vcmask 261120
    %v137 = vsel %vm136, %v128, 0.0
    %138 = vadd.xlane.f32.xlu0 %v137
    %v139 = vpop.xlane.xlu0 %138
    %v140 = vsel %vm136, %v133, 0.0
    %141 = vadd.xlane.f32.xlu0 %v140
    %v142 = vpop.xlane.xlu0 %141
    %v143 = vrcp.pop 32.0
    %v144 = vmul.f32 %v139, %v143
    %v145 = vmul.f32 %v142, %v143
    %v146 = vsub.f32 %v128, %v144
    %v147 = vsub.f32 %v133, %v145
    %v148 = vmul.f32 %v146, %v146
    %v149 = vmul.f32 %v147, %v147
    %v150 = vsel %vm136, %v148, 0.0
    %151 = vadd.xlane.f32.xlu0 %v150
    %v152 = vpop.xlane.xlu0 %151
    %v153 = vsel %vm136, %v149, 0.0
    %154 = vadd.xlane.f32.xlu0 %v153
    %v155 = vpop.xlane.xlu0 %154
    %v156 = vmul.f32 %v152, %v143
    %v157 = vmul.f32 %v155, %v143
    %v158 = vadd.f32 %v156, 1e-05
    %v159 = vadd.f32 %v157, 1e-05
    %v160 = vrsqrt.pop %v158
    %v161 = vrsqrt.pop %v159
    %v162 = vld [vmem:[%s2] sm:$0x1]
    %v163 = vld [vmem:[%s3] sm:$0x1]
    %v164 = vmul.f32 %v146, %v160
    %v165 = vmul.f32 %v147, %v161
    %v167 = vlaneseq
    %v168 = vshrl.u32 %v167, 7
    %v169 = vsub.s32 0, %v168
    %v170 = vrot.slane %v162, %v169
    %v172 = vmul.f32 %v164, %v170
    %v173 = vmul.f32 %v165, %v170
    %v175 = vlaneseq
    %v176 = vshrl.u32 %v175, 7
    %v177 = vsub.s32 0, %v176
    %v178 = vrot.slane %v163, %v177
    %v180 = vadd.f32 %v172, %v178
    %v181 = vadd.f32 %v173, %v178
    %182 = vst.msk [vmem:[#allocation2] sm:$0xff] %vm136, %v180
    %183 = vst.msk [vmem:[#allocation2 + $0x8] sm:$0xff] %vm136, %v181
    // Predicated region
    $region18: #{tpu_custom_call.1} parent=1 // pred_check
      _
    $region19: #{tpu_custom_call.1} parent=1 // pred_check_branch
      %185 = sbr.rel (0) target = $region21
    $region20: #{tpu_custom_call.1} parent=1 // pred_region
      %s187 = ssub.s32 256, 256
      %188 = vsyncadd [#allocation3], %s187
      %s189 = sshll.u32 [#allocation2], 4
      %s190 = int_to_ptr.vmem [resolvable:$true] %s189
      %195 = dma.vmem_to_hbm [thread:$0]  %s190, 256, %s4, [#allocation3], 128, 128, 8
    $region21: #{tpu_custom_call.1} parent=1 // pred_fallthru
      _
    // Predicated region
    $region22: #{tpu_custom_call.1} parent=1 // pred_check
      _
    $region23: #{tpu_custom_call.1} parent=1 // pred_check_branch
      %197 = sbr.rel (0) target = $region25
    $region24: #{tpu_custom_call.1} parent=1 // pred_region
      %198 = dma.done [#allocation3], 256
    $region25: #{tpu_custom_call.1} parent=1 // pred_fallthru
      _
    %199 = vsyncpa [#allocation3], 1

</llo_original>
